<compile_context>
chip_gen: v6e
topology: v6e:2x2x1
jax: 0.10.0
libtpu: 0.0.40
codegen_flags: <defaults>
</compile_context>

<pallas_src>
import jax
import jax.numpy as jnp
from jax.experimental import pallas as pl
from jax.experimental.pallas import tpu as pltpu


def transition_kernel(x_ref, scale_ref, bias_ref, w_ref, o_ref):
    # x_ref:     (1, TH, W, Cin)          one spatial row-tile of one image
    # scale_ref: (1, Cin)                 folded BN scale = gamma / sqrt(var+eps)
    # bias_ref:  (1, Cin)                 folded BN bias  = beta - mean * scale
    # w_ref:     (Cin, Cout) bf16         1x1 conv weight^T with 0.25 folded in
    # o_ref:     (1, TH//2, W//2, Cout)
    x = x_ref[0].astype(jnp.float32)                      # (TH, W, Cin)
    scale = scale_ref[0]                                  # (Cin,)
    bias = bias_ref[0]                                    # (Cin,)

    # BatchNorm (folded) + ReLU -- elementwise on the VPU.
    y = jnp.maximum(x * scale + bias, 0.0)                # (TH, W, Cin)

    TH, W, Cin = y.shape
    TH2, W2 = TH // 2, W // 2

    # 2x2 sum-pool BEFORE the 1x1 conv (they commute); the 1/4 scale is folded
    # into the conv weight in the wrapper.  Row pool first (major-dim regroup,
    # no lane/sublane tile crossing), then column pool.
    y = y.reshape(TH2, 2, W, Cin).sum(axis=1)             # (TH2, W,  Cin)
    y = y.reshape(TH2, W2, 2, Cin).sum(axis=2)            # (TH2, W2, Cin)

    # 1x1 convolution == channel matmul on the MXU: bf16 operands, f32 accum.
    z = jnp.dot(y.reshape(TH2 * W2, Cin).astype(jnp.bfloat16),
                w_ref[...],
                preferred_element_type=jnp.float32)       # (TH2*W2, Cout)
    o_ref[0] = z.reshape(TH2, W2, -1).astype(o_ref.dtype)


def _pick_tile_h(H, target=32):
    """Largest even divisor of H that is <= target (H assumed even)."""
    best = 2
    for th in range(2, min(H, target) + 1, 2):
        if H % th == 0:
            best = th
    return best


def transition_layer(x_nchw, gamma, beta, running_mean, running_var, conv_w,
                     *, eps=1e-5, stride=2, tile_h=None):
    """Forward pass of TransitionLayer.  x_nchw: (N, C, H, W) float32."""
    assert stride == 2, "kernel hard-codes the default AvgPool2d(2, 2)"
    N, C, H, W = x_nchw.shape
    assert H % 2 == 0 and W % 2 == 0, "2x2/stride-2 pool assumes even H and W"
    Cout = conv_w.shape[0]
    Ho, Wo = H // 2, W // 2

    if tile_h is None:
        tile_h = _pick_tile_h(H)
    assert H % tile_h == 0 and tile_h % 2 == 0, (H, tile_h)

    # Plain-JAX glue: layout change + BN folding + weight prep.
    # NOTE: the NCHW<->NHWC transposes are full HBM round trips; keep
    # activations NHWC across layers in a real network to drop them.
    x = jnp.transpose(x_nchw, (0, 2, 3, 1))               # NCHW -> NHWC
    scale = gamma / jnp.sqrt(running_var + eps)            # (C,)
    bias = beta - running_mean * scale                     # (C,)
    # Fold the 0.25 average-pool scale into the (bf16) conv weight.
    w = (conv_w.reshape(Cout, C).T * 0.25).astype(jnp.bfloat16)  # (Cin, Cout)

    grid = (N, H // tile_h)
    itemsize = 4  # f32 activations
    cost = pl.CostEstimate(
        flops=2 * N * Ho * Wo * C * Cout + 4 * N * H * W * C,
        transcendentals=0,
        bytes_accessed=(N * H * W * C * itemsize          # x
                        + N * Ho * Wo * Cout * itemsize   # out
                        + C * Cout * 2                    # w (bf16)
                        + 2 * C * itemsize),              # scale + bias
    )

    out_nhwc = pl.pallas_call(
        transition_kernel,
        out_shape=jax.ShapeDtypeStruct((N, Ho, Wo, Cout), x.dtype),
        grid=grid,
        in_specs=[
            pl.BlockSpec((1, tile_h, W, C), lambda n, h: (n, h, 0, 0)),
            pl.BlockSpec((1, C), lambda n, h: (0, 0)),
            pl.BlockSpec((1, C), lambda n, h: (0, 0)),
            pl.BlockSpec((C, Cout), lambda n, h: (0, 0)),
        ],
        out_specs=pl.BlockSpec((1, tile_h // 2, Wo, Cout),
                               lambda n, h: (n, h, 0, 0)),
        compiler_params=pltpu.CompilerParams(
            dimension_semantics=("parallel", "parallel")),
        cost_estimate=cost,
    )(x, scale.reshape(1, C), bias.reshape(1, C), w)

    return jnp.transpose(out_nhwc, (0, 3, 1, 2))           # NHWC -> NCHW


def reference(x_nchw, gamma, beta, mean, var, conv_w, eps=1e-5):
    """Pure-JAX f32 reference matching eval-mode TransitionLayer."""
    scale = gamma / jnp.sqrt(var + eps)
    bias = beta - mean * scale
    y = x_nchw * scale[None, :, None, None] + bias[None, :, None, None]
    y = jnp.maximum(y, 0.0)
    z = jnp.einsum("nchw,oc->nohw", y, conv_w.reshape(conv_w.shape[0], -1))
    N, Co, H, W = z.shape
    z = z.reshape(N, Co, H // 2, 2, W // 2, 2).mean(axis=(3, 5))
    return z


if __name__ == "__main__":
    # Module hyper-params: num_features=4, theta=0.5 -> out channels = 2
    N, C, H, W = 2, 4, 16, 16
    theta = 0.5
    Cout = int(C * theta)

    key = jax.random.PRNGKey(0)
    kx, kw = jax.random.split(key)
    x = jax.random.normal(kx, (N, C, H, W), dtype=jnp.float32)

    # Deterministic parameter init (shapes from nn.BatchNorm2d / nn.Conv2d)
    gamma = 1.0 + 0.1 * jnp.arange(C, dtype=jnp.float32)          # BN weight
    beta = 0.05 * jnp.arange(C, dtype=jnp.float32)                # BN bias
    running_mean = 0.01 * jnp.arange(C, dtype=jnp.float32)
    running_var = 1.0 + 0.02 * jnp.arange(C, dtype=jnp.float32)
    conv_w = 0.01 * jax.random.normal(kw, (Cout, C, 1, 1), dtype=jnp.float32)

    # tile_h=8 -> grid (2, 2): exercises both the batch and spatial grid axes.
    out = transition_layer(x, gamma, beta, running_mean, running_var, conv_w,
                           tile_h=8)
    out = jax.block_until_ready(out)

    expected = reference(x, gamma, beta, running_mean, running_var, conv_w)
    assert out.shape == (N, Cout, H // 2, W // 2), out.shape
    # Tolerance loosened vs. the pure-f32 version: matmul operands are bf16
    # (f32 accumulation keeps the error small but above 1e-5).
    assert jnp.allclose(out, expected, atol=5e-3, rtol=1e-2), (
        float(jnp.max(jnp.abs(out - expected))))
    print("KERNEL_OK")
</pallas_src>

<mosaic_0001>
module attributes {stable_mosaic.version = 11 : i64} {
  func.func @transition_kernel(%arg0: i32, %arg1: i32, %arg2: memref<1x8x16x4xf32, #tpu.memory_space<vmem>>, %arg3: memref<1x4xf32, #tpu.memory_space<vmem>>, %arg4: memref<1x4xf32, #tpu.memory_space<vmem>>, %arg5: memref<4x2xbf16, #tpu.memory_space<vmem>>, %arg6: memref<1x4x8x2xf32, #tpu.memory_space<vmem>>) attributes {dimension_semantics = [#tpu.dimension_semantics<parallel>, #tpu.dimension_semantics<parallel>], iteration_bounds = array<i64: 2, 2>, scalar_prefetch = 0 : i64, scratch_operands = 0 : i64, tpu.core_type = #tpu.core_type<tc>, window_params = [{transform_indices = @transform_0, window_bounds = array<i64: 1, 8, 16, 4>}, {pipeline_mode = #tpu.pipeline_mode<synchronous>, transform_indices = @transform_1, window_bounds = array<i64: 1, 4>}, {pipeline_mode = #tpu.pipeline_mode<synchronous>, transform_indices = @transform_2, window_bounds = array<i64: 1, 4>}, {pipeline_mode = #tpu.pipeline_mode<synchronous>, transform_indices = @transform_3, window_bounds = array<i64: 4, 2>}, {transform_indices = @transform_4, window_bounds = array<i64: 1, 4, 8, 2>}]} {
    %c0 = arith.constant 0 : index
    %c0_0 = arith.constant 0 : index
    %c0_1 = arith.constant 0 : index
    %c0_2 = arith.constant 0 : index
    %0 = vector.load %arg2[%c0, %c0_0, %c0_1, %c0_2] : memref<1x8x16x4xf32, #tpu.memory_space<vmem>>, vector<1x8x16x4xf32>
    %1 = vector.shape_cast %0 : vector<1x8x16x4xf32> to vector<8x16x4xf32>
    %c0_3 = arith.constant 0 : index
    %c0_4 = arith.constant 0 : index
    %2 = vector.load %arg3[%c0_3, %c0_4] : memref<1x4xf32, #tpu.memory_space<vmem>>, vector<1x4xf32>
    %3 = vector.shape_cast %2 : vector<1x4xf32> to vector<4xf32>
    %c0_5 = arith.constant 0 : index
    %c0_6 = arith.constant 0 : index
    %4 = vector.load %arg4[%c0_5, %c0_6] : memref<1x4xf32, #tpu.memory_space<vmem>>, vector<1x4xf32>
    %5 = vector.shape_cast %4 : vector<1x4xf32> to vector<4xf32>
    %6 = vector.shape_cast %3 : vector<4xf32> to vector<1x1x4xf32>
    %7 = vector.broadcast %6 : vector<1x1x4xf32> to vector<8x16x4xf32>
    %8 = arith.mulf %1, %7 : vector<8x16x4xf32>
    %9 = vector.shape_cast %5 : vector<4xf32> to vector<1x1x4xf32>
    %10 = vector.broadcast %9 : vector<1x1x4xf32> to vector<8x16x4xf32>
    %11 = arith.addf %8, %10 : vector<8x16x4xf32>
    %cst = arith.constant 0.000000e+00 : f32
    %12 = vector.broadcast %cst : f32 to vector<8x16x4xf32>
    %13 = arith.maximumf %11, %12 : vector<8x16x4xf32>
    %14 = vector.shape_cast %13 : vector<8x16x4xf32> to vector<4x2x16x4xf32>
    %cst_7 = arith.constant dense<0.000000e+00> : vector<4x16x4xf32>
    %15 = vector.multi_reduction <add>, %14, %cst_7 [1] : vector<4x2x16x4xf32> to vector<4x16x4xf32>
    %16 = vector.shape_cast %15 : vector<4x16x4xf32> to vector<4x8x2x4xf32>
    %cst_8 = arith.constant dense<0.000000e+00> : vector<4x8x4xf32>
    %17 = vector.multi_reduction <add>, %16, %cst_8 [2] : vector<4x8x2x4xf32> to vector<4x8x4xf32>
    %18 = vector.shape_cast %17 : vector<4x8x4xf32> to vector<32x4xf32>
    %19 = arith.truncf %18 : vector<32x4xf32> to vector<32x4xbf16>
    %c0_9 = arith.constant 0 : index
    %c0_10 = arith.constant 0 : index
    %20 = vector.load %arg5[%c0_9, %c0_10] : memref<4x2xbf16, #tpu.memory_space<vmem>>, vector<4x2xbf16>
    %cst_11 = arith.constant dense<0.000000e+00> : vector<32x2xf32>
    %21 = tpu.matmul %19, %20, %cst_11 {dimension_numbers = #tpu.dot_dimension_numbers<[1], [0], [0], [1], [0, 0, 1, 1], [], []>} : vector<32x4xbf16>, vector<4x2xbf16>, vector<32x2xf32> -> vector<32x2xf32>
    %22 = vector.shape_cast %21 : vector<32x2xf32> to vector<4x8x2xf32>
    %c0_12 = arith.constant 0 : index
    %c0_13 = arith.constant 0 : index
    %c0_14 = arith.constant 0 : index
    %c0_15 = arith.constant 0 : index
    %23 = vector.load %arg6[%c0_12, %c0_13, %c0_14, %c0_15] : memref<1x4x8x2xf32, #tpu.memory_space<vmem>>, vector<1x4x8x2xf32>
    %24 = vector.shape_cast %23 : vector<1x4x8x2xf32> to vector<4x8x2xf32>
    %25 = vector.shape_cast %22 : vector<4x8x2xf32> to vector<1x4x8x2xf32>
    tpu.vector_store %arg6[%c0_12, %c0_13, %c0_14, %c0_15], %25 {strides = array<i32>} : memref<1x4x8x2xf32, #tpu.memory_space<vmem>>, vector<1x4x8x2xf32>,
    return
  }
  func.func @transform_0(%arg0: i32, %arg1: i32) -> (i32, i32, i32, i32) {
    %c0_i32 = arith.constant 0 : i32
    %c0_i32_0 = arith.constant 0 : i32
    %c0_i32_1 = arith.constant 0 : i32
    return %arg0, %arg1, %c0_i32, %c0_i32_0 : i32, i32, i32, i32
  }
  func.func @transform_1(%arg0: i32, %arg1: i32) -> (i32, i32) {
    %c0_i32 = arith.constant 0 : i32
    %c0_i32_0 = arith.constant 0 : i32
    %c0_i32_1 = arith.constant 0 : i32
    return %c0_i32, %c0_i32_0 : i32, i32
  }
  func.func @transform_2(%arg0: i32, %arg1: i32) -> (i32, i32) {
    %c0_i32 = arith.constant 0 : i32
    %c0_i32_0 = arith.constant 0 : i32
    %c0_i32_1 = arith.constant 0 : i32
    return %c0_i32, %c0_i32_0 : i32, i32
  }
  func.func @transform_3(%arg0: i32, %arg1: i32) -> (i32, i32) {
    %c0_i32 = arith.constant 0 : i32
    %c0_i32_0 = arith.constant 0 : i32
    %c0_i32_1 = arith.constant 0 : i32
    return %c0_i32, %c0_i32_0 : i32, i32
  }
  func.func @transform_4(%arg0: i32, %arg1: i32) -> (i32, i32, i32, i32) {
    %c0_i32 = arith.constant 0 : i32
    %c0_i32_0 = arith.constant 0 : i32
    %c0_i32_1 = arith.constant 0 : i32
    return %arg0, %arg1, %c0_i32, %c0_i32_0 : i32, i32, i32, i32
  }
}

</mosaic_0001>

<llo_original>
// kernel: tpu_custom_call.1
$region0: #{tpu_custom_call.1}
  #allocation0 [shape = 'u32[]', space=smem, size = 0x4, offset = 0x4, fixed_abs, tag = 'smem constant byte address 0x4 - core index']
  #allocation1 [shape = 'u32[144,128]{1,0:T(1,128)}', space=vmem, size = 0x12000, scoped, tag = 'internal scratch']
  %s0 = inlined_call_operand.vmem [shape: f32[2,16,16,4], index: 0, kind: input, shape index: {}]
  %s1 = inlined_call_operand.vmem [shape: f32[1,4], index: 1, kind: input, shape index: {}]
  %s2 = inlined_call_operand.vmem [shape: f32[1,4], index: 2, kind: input, shape index: {}]
  %s3 = inlined_call_operand.vmem [shape: bf16[4,2], index: 3, kind: input, shape index: {}]
  %s4 = inlined_call_operand.vmem [shape: f32[2,8,8,2], index: 4, kind: output, shape index: {}]
  %s5 = sld [smem:[#allocation0]]
  $region49: #{tpu_custom_call.1} parent=0
    _
  %s7 = ssub.s32 1, %s5
  %s8 = scalar_select 0, %s7, %s5
  loop: start=0, step=1, limit=6
  $region2: #{tpu_custom_call.1} parent=0 // loop_pre_header
    _
  $region3: #{tpu_custom_call.1} parent=0 // loop_header
    %s10 = sphi 0, %s14
    %p11 = scmp.ge.s32.totalorder %s10, 6
    %s17 = sphi 0, %s29
    %s18 = sphi 0, %s25
    %s19 = sphi 0, %s17
    %s20 = sphi 0, %s18
    %s21 = sphi 0, %s19
    %s22 = sphi 0, %s20
    %s34 = sphi 0, %s36
    %s37 = sphi 0, %s34
    %s38 = sphi 0, %s37
    %s54 = sphi 0, %s38
    %s58 = sphi 0, %s58
    %s60 = sphi 0, %s58
    %s61 = sphi 0, %s60
    %s75 = sphi 0, %s61
    %s79 = sphi 0, %s79
    %s81 = sphi 0, %s79
    %s82 = sphi 0, %s81
    %s96 = sphi 0, %s82
    %s100 = sphi 0, %s100
    %s102 = sphi 0, %s100
    %s103 = sphi 0, %s102
    %s117 = sphi 0, %s103
    %s125 = sphi 0, %s127
    %s128 = sphi 0, %s125
    %s129 = sphi 0, %s128
    %s145 = sphi 0, %s129
  $region4: #{tpu_custom_call.1} parent=0 // loop_header_branch
    %13 = sbr.rel (%p11) target = $region8
  $region5: #{tpu_custom_call.1} parent=0 // loop_body
    %s15 = ssub.s32 %s10, 1
    %s16 = ssub.s32 %s10, 2
    %s23 = sadd.s32 1, %s18
    %p24 = scmp.ge.s32.totalorder %s23, 2
    %s25 = scalar_select %p24, 0, %s23
    %s26 = sadd.s32 1, %s17
    %s27 = scalar_select %p24, %s26, %s17
    %p28 = scmp.ge.s32.totalorder %s27, 2
    %s29 = scalar_select %p28, 0, %s27
    %s30 = ssub.s32 %s17, %s29
    %s31 = ssub.s32 %s18, %s25
    %s32 = sor.u32 %s30, %s31
    %p33 = scmp.eq.s32.totalorder %s32, 0
    %s35 = sadd.s32 %s34, 1
    %s36 = scalar_select %p33, %s34, %s35
    %p39 = pneg %p33
    %p40 = scmp.eq.s32.totalorder %s10, 3
    %p41 = por %p39, %p40
    %p42 = scmp.ne.s32.totalorder %s34, %s37
    %p43 = scmp.eq.s32.totalorder %s10, 0
    %p44 = por %p42, %p43
    %p45 = scmp.ne.s32.totalorder %s34, %s37
    %p46 = scmp.eq.s32.totalorder %s15, 3
    %p47 = por %p45, %p46
    %p48 = scmp.ne.s32.totalorder %s37, %s38
    %p49 = scmp.eq.s32.totalorder %s15, 0
    %p50 = por %p48, %p49
    %p51 = scmp.ne.s32.totalorder %s37, %s38
    %p52 = scmp.eq.s32.totalorder %s16, 3
    %p53 = por %p51, %p52
    %p55 = scmp.ne.s32.totalorder %s38, %s54
    %p56 = scmp.eq.s32.totalorder %s16, 0
    %p57 = por %p55, %p56
    %s59 = sadd.s32 %s58, 1
    %p62 = scmp.eq.s32.totalorder %s10, 3
    %p63 = scmp.ne.s32.totalorder %s58, %s60
    %p64 = scmp.eq.s32.totalorder %s10, 0
    %p65 = por %p63, %p64
    %p66 = scmp.ne.s32.totalorder %s58, %s60
    %p67 = scmp.eq.s32.totalorder %s15, 3
    %p68 = por %p66, %p67
    %p69 = scmp.ne.s32.totalorder %s60, %s61
    %p70 = scmp.eq.s32.totalorder %s15, 0
    %p71 = por %p69, %p70
    %p72 = scmp.ne.s32.totalorder %s60, %s61
    %p73 = scmp.eq.s32.totalorder %s16, 3
    %p74 = por %p72, %p73
    %p76 = scmp.ne.s32.totalorder %s61, %s75
    %p77 = scmp.eq.s32.totalorder %s16, 0
    %p78 = por %p76, %p77
    %s80 = sadd.s32 %s79, 1
    %p83 = scmp.eq.s32.totalorder %s10, 3
    %p84 = scmp.ne.s32.totalorder %s79, %s81
    %p85 = scmp.eq.s32.totalorder %s10, 0
    %p86 = por %p84, %p85
    %p87 = scmp.ne.s32.totalorder %s79, %s81
    %p88 = scmp.eq.s32.totalorder %s15, 3
    %p89 = por %p87, %p88
    %p90 = scmp.ne.s32.totalorder %s81, %s82
    %p91 = scmp.eq.s32.totalorder %s15, 0
    %p92 = por %p90, %p91
    %p93 = scmp.ne.s32.totalorder %s81, %s82
    %p94 = scmp.eq.s32.totalorder %s16, 3
    %p95 = por %p93, %p94
    %p97 = scmp.ne.s32.totalorder %s82, %s96
    %p98 = scmp.eq.s32.totalorder %s16, 0
    %p99 = por %p97, %p98
    %s101 = sadd.s32 %s100, 1
    %p104 = scmp.eq.s32.totalorder %s10, 3
    %p105 = scmp.ne.s32.totalorder %s100, %s102
    %p106 = scmp.eq.s32.totalorder %s10, 0
    %p107 = por %p105, %p106
    %p108 = scmp.ne.s32.totalorder %s100, %s102
    %p109 = scmp.eq.s32.totalorder %s15, 3
    %p110 = por %p108, %p109
    %p111 = scmp.ne.s32.totalorder %s102, %s103
    %p112 = scmp.eq.s32.totalorder %s15, 0
    %p113 = por %p111, %p112
    %p114 = scmp.ne.s32.totalorder %s102, %s103
    %p115 = scmp.eq.s32.totalorder %s16, 3
    %p116 = por %p114, %p115
    %p118 = scmp.ne.s32.totalorder %s103, %s117
    %p119 = scmp.eq.s32.totalorder %s16, 0
    %p120 = por %p118, %p119
    %s121 = ssub.s32 %s17, %s29
    %s122 = ssub.s32 %s18, %s25
    %s123 = sor.u32 %s121, %s122
    %p124 = scmp.eq.s32.totalorder %s123, 0
    %s126 = sadd.s32 %s125, 1
    %s127 = scalar_select %p124, %s125, %s126
    %p130 = pneg %p124
    %p131 = scmp.eq.s32.totalorder %s10, 3
    %p132 = por %p130, %p131
    %p133 = scmp.ne.s32.totalorder %s125, %s128
    %p134 = scmp.eq.s32.totalorder %s10, 0
    %p135 = por %p133, %p134
    %p136 = scmp.ne.s32.totalorder %s125, %s128
    %p137 = scmp.eq.s32.totalorder %s15, 3
    %p138 = por %p136, %p137
    %p139 = scmp.ne.s32.totalorder %s128, %s129
    %p140 = scmp.eq.s32.totalorder %s15, 0
    %p141 = por %p139, %p140
    %p142 = scmp.ne.s32.totalorder %s128, %s129
    %p143 = scmp.eq.s32.totalorder %s16, 3
    %p144 = por %p142, %p143
    %p146 = scmp.ne.s32.totalorder %s129, %s145
    %p147 = scmp.eq.s32.totalorder %s16, 0
    %p148 = por %p146, %p147
    %p149 = scmp.le.s32.totalorder 1, %s10
    %p150 = scmp.lt.s32.totalorder %s10, 5
    %p151 = pnand %p149, %p150
    %p152 = pneg %p151
    // Predicated region
    $region9: #{tpu_custom_call.1} parent=5 // pred_check
      _
    $region10: #{tpu_custom_call.1} parent=5 // pred_check_branch
      %154 = sbr.rel (%p151) target = $region12
    $region11: #{tpu_custom_call.1} parent=5 // pred_region
      %s155 = ssub.s32 %s10, 1
      // Predicated region
      $region13: #{tpu_custom_call.1} parent=11 // pred_check
        %p156 = pneg %p71
      $region14: #{tpu_custom_call.1} parent=11 // pred_check_branch
        %158 = sbr.rel (%p156) target = $region16
      $region15: #{tpu_custom_call.1} parent=11 // pred_region
        _
      $region16: #{tpu_custom_call.1} parent=11 // pred_fallthru
        _
      // Predicated region
      $region17: #{tpu_custom_call.1} parent=11 // pred_check
        %p159 = pneg %p92
      $region18: #{tpu_custom_call.1} parent=11 // pred_check_branch
        %161 = sbr.rel (%p159) target = $region20
      $region19: #{tpu_custom_call.1} parent=11 // pred_region
        _
      $region20: #{tpu_custom_call.1} parent=11 // pred_fallthru
        _
      // Predicated region
      $region21: #{tpu_custom_call.1} parent=11 // pred_check
        %p162 = pneg %p113
      $region22: #{tpu_custom_call.1} parent=11 // pred_check_branch
        %164 = sbr.rel (%p162) target = $region24
      $region23: #{tpu_custom_call.1} parent=11 // pred_region
        _
      $region24: #{tpu_custom_call.1} parent=11 // pred_fallthru
        _
    $region12: #{tpu_custom_call.1} parent=5 // pred_fallthru
      _
    %p165 = scmp.lt.s32.totalorder %s10, 4
    // Predicated region
    $region25: #{tpu_custom_call.1} parent=5 // pred_check
      %p166 = pneg %p165
    $region26: #{tpu_custom_call.1} parent=5 // pred_check_branch
      %168 = sbr.rel (%p166) target = $region28
    $region27: #{tpu_custom_call.1} parent=5 // pred_region
      // Predicated region
      $region29: #{tpu_custom_call.1} parent=27 // pred_check
        %p169 = pneg %p44
      $region30: #{tpu_custom_call.1} parent=27 // pred_check_branch
        %171 = sbr.rel (%p169) target = $region32
      $region31: #{tpu_custom_call.1} parent=27 // pred_region
        %s172 = smul.u32 8, %s18
        %p173 = scmp.lt.s32.totalorder %s17, 1
        %s174 = scalar_select %p173, %s17, 1
        %p175 = scmp.lt.s32.totalorder %s172, 15
        %s176 = scalar_select %p175, %s172, 15
        %s177 = smul.addr %s176, 2
        %s178 = smul.addr %s174, 32
        %s179 = sadd.s32 %s177, %s178
        %s180 = smul.addr %s179, 8
        %s181 = scalar_lea.vmem %s0, %s180
        %s182 = smul.u32 8, %s18
      $region32: #{tpu_custom_call.1} parent=27 // pred_fallthru
        _
    $region28: #{tpu_custom_call.1} parent=5 // pred_fallthru
      _
    %p183 = scmp.le.s32.totalorder 1, %s10
    %p184 = scmp.lt.s32.totalorder %s10, 5
    %p185 = pnand %p183, %p184
    %p186 = pneg %p185
    // Predicated region
    $region33: #{tpu_custom_call.1} parent=5 // pred_check
      _
    $region34: #{tpu_custom_call.1} parent=5 // pred_check_branch
      %188 = sbr.rel (%p185) target = $region36
    $region35: #{tpu_custom_call.1} parent=5 // pred_region
      %s189 = ssub.s32 %s10, 1
      %s190 = smul.u32 8, %s20
      %p191 = scmp.lt.s32.totalorder %s19, 1
      %s192 = scalar_select %p191, %s19, 1
      %p193 = scmp.lt.s32.totalorder %s190, 15
      %s194 = scalar_select %p193, %s190, 15
      %s195 = smul.addr %s194, 2
      %s196 = smul.addr %s192, 32
      %s197 = sadd.s32 %s195, %s196
      %s198 = smul.addr %s197, 8
      %s199 = scalar_lea.vmem %s0, %s198
      %p200 = pneg %p50
      %p201 = pneg %p47
      %p202 = pneg %p71
      %p203 = pneg %p68
      %p204 = pneg %p92
      %p205 = pneg %p89
      %p206 = pneg %p113
      %p207 = pneg %p110
      %p208 = pneg %p141
      %p209 = pneg %p138
      %s210 = smul.u32 4, %s20
      %p211 = scmp.lt.s32.totalorder %s19, 1
      %s212 = scalar_select %p211, %s19, 1
      %p213 = scmp.lt.s32.totalorder %s210, 7
      %s214 = scalar_select %p213, %s210, 7
      %s215 = smul.addr %s212, 8
      %s216 = sadd.s32 %s214, %s215
      %s217 = smul.addr %s216, 8
      %s218 = scalar_lea.vmem %s4, %s217
      %s219 = smul.u32 8, %s20
      %p220 = scmp.lt.s32.totalorder %s19, 1
      %s221 = scalar_select %p220, %s19, 1
      %p222 = scmp.lt.s32.totalorder %s219, 15
      %s223 = scalar_select %p222, %s219, 15
      %s224 = smul.addr %s223, 2
      %s225 = smul.addr %s221, 32
      %s226 = sadd.s32 %s224, %s225
      %s227 = smul.addr %s226, 8
      %s228 = scalar_lea.vmem %s0, %s227
      %s229 = smul.u32 8, %s20
      %s230 = smul.u32 4, %s20
      %p231 = scmp.lt.s32.totalorder %s19, 1
      %s232 = scalar_select %p231, %s19, 1
      %p233 = scmp.lt.s32.totalorder %s230, 7
      %s234 = scalar_select %p233, %s230, 7
      %s235 = smul.addr %s232, 8
      %s236 = sadd.s32 %s234, %s235
      %s237 = smul.addr %s236, 8
      %s238 = scalar_lea.vmem %s4, %s237
      %s239 = smul.u32 4, %s20
      %v241 = vld [vmem:[%s228] sm:$0xff]
      %v242 = vld [vmem:[%s228 + $0x8] sm:$0xff]
      %v243 = vld [vmem:[%s228 + $0x10] sm:$0xff]
      %v244 = vld [vmem:[%s228 + $0x18] sm:$0xff]
      %v245 = vld [vmem:[%s228 + $0x20] sm:$0xff]
      %v246 = vld [vmem:[%s228 + $0x28] sm:$0xff]
      %v247 = vld [vmem:[%s228 + $0x30] sm:$0xff]
      %v248 = vld [vmem:[%s228 + $0x38] sm:$0xff]
      %v249 = vld [vmem:[%s228 + $0x40] sm:$0xff]
      %v250 = vld [vmem:[%s228 + $0x48] sm:$0xff]
      %v251 = vld [vmem:[%s228 + $0x50] sm:$0xff]
      %v252 = vld [vmem:[%s228 + $0x58] sm:$0xff]
      %v253 = vld [vmem:[%s228 + $0x60] sm:$0xff]
      %v254 = vld [vmem:[%s228 + $0x68] sm:$0xff]
      %v255 = vld [vmem:[%s228 + $0x70] sm:$0xff]
      %v256 = vld [vmem:[%s228 + $0x78] sm:$0xff]
      %v257 = vld [vmem:[%s1] sm:$0x1]
      %v258 = vld [vmem:[%s2] sm:$0x1]
      %v260 = vlaneseq
      %v261 = vshrl.u32 %v260, 7
      %v262 = vsub.s32 0, %v261
      %v263 = vrot.slane %v257, %v262
      %v265 = vmul.f32 %v241, %v263
      %v266 = vmul.f32 %v242, %v263
      %v267 = vmul.f32 %v243, %v263
      %v268 = vmul.f32 %v244, %v263
      %v269 = vmul.f32 %v245, %v263
      %v270 = vmul.f32 %v246, %v263
      %v271 = vmul.f32 %v247, %v263
      %v272 = vmul.f32 %v248, %v263
      %v273 = vmul.f32 %v249, %v263
      %v274 = vmul.f32 %v250, %v263
      %v275 = vmul.f32 %v251, %v263
      %v276 = vmul.f32 %v252, %v263
      %v277 = vmul.f32 %v253, %v263
      %v278 = vmul.f32 %v254, %v263
      %v279 = vmul.f32 %v255, %v263
      %v280 = vmul.f32 %v256, %v263
      %v282 = vlaneseq
      %v283 = vshrl.u32 %v282, 7
      %v284 = vsub.s32 0, %v283
      %v285 = vrot.slane %v258, %v284
      %v287 = vadd.f32 %v265, %v285
      %v288 = vadd.f32 %v266, %v285
      %v289 = vadd.f32 %v267, %v285
      %v290 = vadd.f32 %v268, %v285
      %v291 = vadd.f32 %v269, %v285
      %v292 = vadd.f32 %v270, %v285
      %v293 = vadd.f32 %v271, %v285
      %v294 = vadd.f32 %v272, %v285
      %v295 = vadd.f32 %v273, %v285
      %v296 = vadd.f32 %v274, %v285
      %v297 = vadd.f32 %v275, %v285
      %v298 = vadd.f32 %v276, %v285
      %v299 = vadd.f32 %v277, %v285
      %v300 = vadd.f32 %v278, %v285
      %v301 = vadd.f32 %v279, %v285
      %v302 = vadd.f32 %v280, %v285
      %v303 = vmax.f32 %v287, 0.0
      %v304 = vmax.f32 %v288, 0.0
      %v305 = vmax.f32 %v289, 0.0
      %v306 = vmax.f32 %v290, 0.0
      %v307 = vmax.f32 %v291, 0.0
      %v308 = vmax.f32 %v292, 0.0
      %v309 = vmax.f32 %v293, 0.0
      %v310 = vmax.f32 %v294, 0.0
      %v311 = vmax.f32 %v295, 0.0
      %v312 = vmax.f32 %v296, 0.0
      %v313 = vmax.f32 %v297, 0.0
      %v314 = vmax.f32 %v298, 0.0
      %v315 = vmax.f32 %v299, 0.0
      %v316 = vmax.f32 %v300, 0.0
      %v317 = vmax.f32 %v301, 0.0
      %v318 = vmax.f32 %v302, 0.0
      %vm319 = vcmask 31744
      %v320 = vsel %vm319, %v303, 0.0
      %v321 = vsel %vm319, %v305, 0.0
      %v322 = vadd.f32 %v320, %v321
      %v323 = vsel %vm319, %v304, 0.0
      %v324 = vsel %vm319, %v306, 0.0
      %v325 = vadd.f32 %v323, %v324
      %v326 = vsel %vm319, %v307, 0.0
      %v327 = vsel %vm319, %v309, 0.0
      %v328 = vadd.f32 %v326, %v327
      %v329 = vsel %vm319, %v308, 0.0
      %v330 = vsel %vm319, %v310, 0.0
      %v331 = vadd.f32 %v329, %v330
      %v332 = vsel %vm319, %v311, 0.0
      %v333 = vsel %vm319, %v313, 0.0
      %v334 = vadd.f32 %v332, %v333
      %v335 = vsel %vm319, %v312, 0.0
      %v336 = vsel %vm319, %v314, 0.0
      %v337 = vadd.f32 %v335, %v336
      %v338 = vsel %vm319, %v315, 0.0
      %v339 = vsel %vm319, %v317, 0.0
      %v340 = vadd.f32 %v338, %v339
      %v341 = vsel %vm319, %v316, 0.0
      %v342 = vsel %vm319, %v318, 0.0
      %v343 = vadd.f32 %v341, %v342
      %v352 = vcombine.high %v322, %v322
      %v354 = vunpack.c.l.s4 1983009808
      %v355 = vunpack.c.0.s8 %v354
      %v356 = vlaneseq
      %v357 = vshrl.u32 %v356, 7
      %v358 = vsub.s32 %v355, %v357
      %v359 = vrot.slane %v322, %v358
      %v361 = vunpack.c.l.s4 1983009808
      %v362 = vunpack.c.0.s8 %v361
      %v363 = vlaneseq
      %v364 = vshrl.u32 %v363, 7
      %v365 = vsub.s32 %v362, %v364
      %v366 = vrot.slane %v352, %v365
      %v367 = vcombine.high %v359, %v359
      %v368 = vcombine.high %v366, %v366
      %v369 = vcombine.high %v325, %v325
      %v371 = vunpack.c.l.s4 1983009808
      %v372 = vunpack.c.0.s8 %v371
      %v373 = vlaneseq
      %v374 = vshrl.u32 %v373, 7
      %v375 = vsub.s32 %v372, %v374
      %v376 = vrot.slane %v325, %v375
      %v378 = vunpack.c.l.s4 1983009808
      %v379 = vunpack.c.0.s8 %v378
      %v380 = vlaneseq
      %v381 = vshrl.u32 %v380, 7
      %v382 = vsub.s32 %v379, %v381
      %v383 = vrot.slane %v369, %v382
      %v384 = vcombine.high %v376, %v376
      %v385 = vcombine.high %v383, %v383
      %v386 = vcombine.high %v328, %v328
      %v388 = vunpack.c.l.s4 1983009808
      %v389 = vunpack.c.0.s8 %v388
      %v390 = vlaneseq
      %v391 = vshrl.u32 %v390, 7
      %v392 = vsub.s32 %v389, %v391
      %v393 = vrot.slane %v328, %v392
      %v395 = vunpack.c.l.s4 1983009808
      %v396 = vunpack.c.0.s8 %v395
      %v397 = vlaneseq
      %v398 = vshrl.u32 %v397, 7
      %v399 = vsub.s32 %v396, %v398
      %v400 = vrot.slane %v386, %v399
      %v401 = vcombine.high %v393, %v393
      %v402 = vcombine.high %v400, %v400
      %v403 = vcombine.high %v331, %v331
      %v405 = vunpack.c.l.s4 1983009808
      %v406 = vunpack.c.0.s8 %v405
      %v407 = vlaneseq
      %v408 = vshrl.u32 %v407, 7
      %v409 = vsub.s32 %v406, %v408
      %v410 = vrot.slane %v331, %v409
      %v412 = vunpack.c.l.s4 1983009808
      %v413 = vunpack.c.0.s8 %v412
      %v414 = vlaneseq
      %v415 = vshrl.u32 %v414, 7
      %v416 = vsub.s32 %v413, %v415
      %v417 = vrot.slane %v403, %v416
      %v418 = vcombine.high %v410, %v410
      %v419 = vcombine.high %v417, %v417
      %v420 = vcombine.high %v334, %v334
      %v422 = vunpack.c.l.s4 1983009808
      %v423 = vunpack.c.0.s8 %v422
      %v424 = vlaneseq
      %v425 = vshrl.u32 %v424, 7
      %v426 = vsub.s32 %v423, %v425
      %v427 = vrot.slane %v334, %v426
      %v429 = vunpack.c.l.s4 1983009808
      %v430 = vunpack.c.0.s8 %v429
      %v431 = vlaneseq
      %v432 = vshrl.u32 %v431, 7
      %v433 = vsub.s32 %v430, %v432
      %v434 = vrot.slane %v420, %v433
      %v435 = vcombine.high %v427, %v427
      %v436 = vcombine.high %v434, %v434
      %v437 = vcombine.high %v337, %v337
      %v439 = vunpack.c.l.s4 1983009808
      %v440 = vunpack.c.0.s8 %v439
      %v441 = vlaneseq
      %v442 = vshrl.u32 %v441, 7
      %v443 = vsub.s32 %v440, %v442
      %v444 = vrot.slane %v337, %v443
      %v446 = vunpack.c.l.s4 1983009808
      %v447 = vunpack.c.0.s8 %v446
      %v448 = vlaneseq
      %v449 = vshrl.u32 %v448, 7
      %v450 = vsub.s32 %v447, %v449
      %v451 = vrot.slane %v437, %v450
      %v452 = vcombine.high %v444, %v444
      %v453 = vcombine.high %v451, %v451
      %v454 = vcombine.high %v340, %v340
      %v456 = vunpack.c.l.s4 1983009808
      %v457 = vunpack.c.0.s8 %v456
      %v458 = vlaneseq
      %v459 = vshrl.u32 %v458, 7
      %v460 = vsub.s32 %v457, %v459
      %v461 = vrot.slane %v340, %v460
      %v463 = vunpack.c.l.s4 1983009808
      %v464 = vunpack.c.0.s8 %v463
      %v465 = vlaneseq
      %v466 = vshrl.u32 %v465, 7
      %v467 = vsub.s32 %v464, %v466
      %v468 = vrot.slane %v454, %v467
      %v469 = vcombine.high %v461, %v461
      %v470 = vcombine.high %v468, %v468
      %v471 = vcombine.high %v343, %v343
      %v473 = vunpack.c.l.s4 1983009808
      %v474 = vunpack.c.0.s8 %v473
      %v475 = vlaneseq
      %v476 = vshrl.u32 %v475, 7
      %v477 = vsub.s32 %v474, %v476
      %v478 = vrot.slane %v343, %v477
      %v480 = vunpack.c.l.s4 1983009808
      %v481 = vunpack.c.0.s8 %v480
      %v482 = vlaneseq
      %v483 = vshrl.u32 %v482, 7
      %v484 = vsub.s32 %v481, %v483
      %v485 = vrot.slane %v471, %v484
      %v486 = vcombine.high %v478, %v478
      %v487 = vcombine.high %v485, %v485
      %vm520 = vcmask 25600
      %v521 = vsel %vm520, %v359, 0.0
      %v522 = vrot.slane %v521, 4
      %v523 = vadd.f32 %v521, %v522
      %v524 = vrot.slane %v523, 2
      %v525 = vadd.f32 %v523, %v524
      %v526 = vrot.slane %v525, 1
      %v527 = vadd.f32 %v525, %v526
      %v528 = vsel %vm520, %v367, 0.0
      %v529 = vrot.slane %v528, 4
      %v530 = vadd.f32 %v528, %v529
      %v531 = vrot.slane %v530, 2
      %v532 = vadd.f32 %v530, %v531
      %v533 = vrot.slane %v532, 1
      %v534 = vadd.f32 %v532, %v533
      %v535 = vsel %vm520, %v366, 0.0
      %v536 = vrot.slane %v535, 4
      %v537 = vadd.f32 %v535, %v536
      %v538 = vrot.slane %v537, 2
      %v539 = vadd.f32 %v537, %v538
      %v540 = vrot.slane %v539, 1
      %v541 = vadd.f32 %v539, %v540
      %v542 = vsel %vm520, %v368, 0.0
      %v543 = vrot.slane %v542, 4
      %v544 = vadd.f32 %v542, %v543
      %v545 = vrot.slane %v544, 2
      %v546 = vadd.f32 %v544, %v545
      %v547 = vrot.slane %v546, 1
      %v548 = vadd.f32 %v546, %v547
      %v549 = vsel %vm520, %v376, 0.0
      %v550 = vrot.slane %v549, 4
      %v551 = vadd.f32 %v549, %v550
      %v552 = vrot.slane %v551, 2
      %v553 = vadd.f32 %v551, %v552
      %v554 = vrot.slane %v553, 1
      %v555 = vadd.f32 %v553, %v554
      %v556 = vsel %vm520, %v384, 0.0
      %v557 = vrot.slane %v556, 4
      %v558 = vadd.f32 %v556, %v557
      %v559 = vrot.slane %v558, 2
      %v560 = vadd.f32 %v558, %v559
      %v561 = vrot.slane %v560, 1
      %v562 = vadd.f32 %v560, %v561
      %v563 = vsel %vm520, %v383, 0.0
      %v564 = vrot.slane %v563, 4
      %v565 = vadd.f32 %v563, %v564
      %v566 = vrot.slane %v565, 2
      %v567 = vadd.f32 %v565, %v566
      %v568 = vrot.slane %v567, 1
      %v569 = vadd.f32 %v567, %v568
      %v570 = vsel %vm520, %v385, 0.0
      %v571 = vrot.slane %v570, 4
      %v572 = vadd.f32 %v570, %v571
      %v573 = vrot.slane %v572, 2
      %v574 = vadd.f32 %v572, %v573
      %v575 = vrot.slane %v574, 1
      %v576 = vadd.f32 %v574, %v575
      %v577 = vsel %vm520, %v393, 0.0
      %v578 = vrot.slane %v577, 4
      %v579 = vadd.f32 %v577, %v578
      %v580 = vrot.slane %v579, 2
      %v581 = vadd.f32 %v579, %v580
      %v582 = vrot.slane %v581, 1
      %v583 = vadd.f32 %v581, %v582
      %v584 = vsel %vm520, %v401, 0.0
      %v585 = vrot.slane %v584, 4
      %v586 = vadd.f32 %v584, %v585
      %v587 = vrot.slane %v586, 2
      %v588 = vadd.f32 %v586, %v587
      %v589 = vrot.slane %v588, 1
      %v590 = vadd.f32 %v588, %v589
      %v591 = vsel %vm520, %v400, 0.0
      %v592 = vrot.slane %v591, 4
      %v593 = vadd.f32 %v591, %v592
      %v594 = vrot.slane %v593, 2
      %v595 = vadd.f32 %v593, %v594
      %v596 = vrot.slane %v595, 1
      %v597 = vadd.f32 %v595, %v596
      %v598 = vsel %vm520, %v402, 0.0
      %v599 = vrot.slane %v598, 4
      %v600 = vadd.f32 %v598, %v599
      %v601 = vrot.slane %v600, 2
      %v602 = vadd.f32 %v600, %v601
      %v603 = vrot.slane %v602, 1
      %v604 = vadd.f32 %v602, %v603
      %v605 = vsel %vm520, %v410, 0.0
      %v606 = vrot.slane %v605, 4
      %v607 = vadd.f32 %v605, %v606
      %v608 = vrot.slane %v607, 2
      %v609 = vadd.f32 %v607, %v608
      %v610 = vrot.slane %v609, 1
      %v611 = vadd.f32 %v609, %v610
      %v612 = vsel %vm520, %v418, 0.0
      %v613 = vrot.slane %v612, 4
      %v614 = vadd.f32 %v612, %v613
      %v615 = vrot.slane %v614, 2
      %v616 = vadd.f32 %v614, %v615
      %v617 = vrot.slane %v616, 1
      %v618 = vadd.f32 %v616, %v617
      %v619 = vsel %vm520, %v417, 0.0
      %v620 = vrot.slane %v619, 4
      %v621 = vadd.f32 %v619, %v620
      %v622 = vrot.slane %v621, 2
      %v623 = vadd.f32 %v621, %v622
      %v624 = vrot.slane %v623, 1
      %v625 = vadd.f32 %v623, %v624
      %v626 = vsel %vm520, %v419, 0.0
      %v627 = vrot.slane %v626, 4
      %v628 = vadd.f32 %v626, %v627
      %v629 = vrot.slane %v628, 2
      %v630 = vadd.f32 %v628, %v629
      %v631 = vrot.slane %v630, 1
      %v632 = vadd.f32 %v630, %v631
      %v633 = vsel %vm520, %v427, 0.0
      %v634 = vrot.slane %v633, 4
      %v635 = vadd.f32 %v633, %v634
      %v636 = vrot.slane %v635, 2
      %v637 = vadd.f32 %v635, %v636
      %v638 = vrot.slane %v637, 1
      %v639 = vadd.f32 %v637, %v638
      %v640 = vsel %vm520, %v435, 0.0
      %v641 = vrot.slane %v640, 4
      %v642 = vadd.f32 %v640, %v641
      %v643 = vrot.slane %v642, 2
      %v644 = vadd.f32 %v642, %v643
      %v645 = vrot.slane %v644, 1
      %v646 = vadd.f32 %v644, %v645
      %v647 = vsel %vm520, %v434, 0.0
      %v648 = vrot.slane %v647, 4
      %v649 = vadd.f32 %v647, %v648
      %v650 = vrot.slane %v649, 2
      %v651 = vadd.f32 %v649, %v650
      %v652 = vrot.slane %v651, 1
      %v653 = vadd.f32 %v651, %v652
      %v654 = vsel %vm520, %v436, 0.0
      %v655 = vrot.slane %v654, 4
      %v656 = vadd.f32 %v654, %v655
      %v657 = vrot.slane %v656, 2
      %v658 = vadd.f32 %v656, %v657
      %v659 = vrot.slane %v658, 1
      %v660 = vadd.f32 %v658, %v659
      %v661 = vsel %vm520, %v444, 0.0
      %v662 = vrot.slane %v661, 4
      %v663 = vadd.f32 %v661, %v662
      %v664 = vrot.slane %v663, 2
      %v665 = vadd.f32 %v663, %v664
      %v666 = vrot.slane %v665, 1
      %v667 = vadd.f32 %v665, %v666
      %v668 = vsel %vm520, %v452, 0.0
      %v669 = vrot.slane %v668, 4
      %v670 = vadd.f32 %v668, %v669
      %v671 = vrot.slane %v670, 2
      %v672 = vadd.f32 %v670, %v671
      %v673 = vrot.slane %v672, 1
      %v674 = vadd.f32 %v672, %v673
      %v675 = vsel %vm520, %v451, 0.0
      %v676 = vrot.slane %v675, 4
      %v677 = vadd.f32 %v675, %v676
      %v678 = vrot.slane %v677, 2
      %v679 = vadd.f32 %v677, %v678
      %v680 = vrot.slane %v679, 1
      %v681 = vadd.f32 %v679, %v680
      %v682 = vsel %vm520, %v453, 0.0
      %v683 = vrot.slane %v682, 4
      %v684 = vadd.f32 %v682, %v683
      %v685 = vrot.slane %v684, 2
      %v686 = vadd.f32 %v684, %v685
      %v687 = vrot.slane %v686, 1
      %v688 = vadd.f32 %v686, %v687
      %v689 = vsel %vm520, %v461, 0.0
      %v690 = vrot.slane %v689, 4
      %v691 = vadd.f32 %v689, %v690
      %v692 = vrot.slane %v691, 2
      %v693 = vadd.f32 %v691, %v692
      %v694 = vrot.slane %v693, 1
      %v695 = vadd.f32 %v693, %v694
      %v696 = vsel %vm520, %v469, 0.0
      %v697 = vrot.slane %v696, 4
      %v698 = vadd.f32 %v696, %v697
      %v699 = vrot.slane %v698, 2
      %v700 = vadd.f32 %v698, %v699
      %v701 = vrot.slane %v700, 1
      %v702 = vadd.f32 %v700, %v701
      %v703 = vsel %vm520, %v468, 0.0
      %v704 = vrot.slane %v703, 4
      %v705 = vadd.f32 %v703, %v704
      %v706 = vrot.slane %v705, 2
      %v707 = vadd.f32 %v705, %v706
      %v708 = vrot.slane %v707, 1
      %v709 = vadd.f32 %v707, %v708
      %v710 = vsel %vm520, %v470, 0.0
      %v711 = vrot.slane %v710, 4
      %v712 = vadd.f32 %v710, %v711
      %v713 = vrot.slane %v712, 2
      %v714 = vadd.f32 %v712, %v713
      %v715 = vrot.slane %v714, 1
      %v716 = vadd.f32 %v714, %v715
      %v717 = vsel %vm520, %v478, 0.0
      %v718 = vrot.slane %v717, 4
      %v719 = vadd.f32 %v717, %v718
      %v720 = vrot.slane %v719, 2
      %v721 = vadd.f32 %v719, %v720
      %v722 = vrot.slane %v721, 1
      %v723 = vadd.f32 %v721, %v722
      %v724 = vsel %vm520, %v486, 0.0
      %v725 = vrot.slane %v724, 4
      %v726 = vadd.f32 %v724, %v725
      %v727 = vrot.slane %v726, 2
      %v728 = vadd.f32 %v726, %v727
      %v729 = vrot.slane %v728, 1
      %v730 = vadd.f32 %v728, %v729
      %v731 = vsel %vm520, %v485, 0.0
      %v732 = vrot.slane %v731, 4
      %v733 = vadd.f32 %v731, %v732
      %v734 = vrot.slane %v733, 2
      %v735 = vadd.f32 %v733, %v734
      %v736 = vrot.slane %v735, 1
      %v737 = vadd.f32 %v735, %v736
      %v738 = vsel %vm520, %v487, 0.0
      %v739 = vrot.slane %v738, 4
      %v740 = vadd.f32 %v738, %v739
      %v741 = vrot.slane %v740, 2
      %v742 = vadd.f32 %v740, %v741
      %v743 = vrot.slane %v742, 1
      %v744 = vadd.f32 %v742, %v743
      %v745 = vpack.c.bf16 %v527, %v527
      %v746 = vpack.c.bf16 %v534, %v534
      %v747 = vpack.c.bf16 %v541, %v541
      %v748 = vpack.c.bf16 %v548, %v548
      %v749 = vpack.c.bf16 %v555, %v555
      %v750 = vpack.c.bf16 %v562, %v562
      %v751 = vpack.c.bf16 %v569, %v569
      %v752 = vpack.c.bf16 %v576, %v576
      %v753 = vpack.c.bf16 %v583, %v583
      %v754 = vpack.c.bf16 %v590, %v590
      %v755 = vpack.c.bf16 %v597, %v597
      %v756 = vpack.c.bf16 %v604, %v604
      %v757 = vpack.c.bf16 %v611, %v611
      %v758 = vpack.c.bf16 %v618, %v618
      %v759 = vpack.c.bf16 %v625, %v625
      %v760 = vpack.c.bf16 %v632, %v632
      %v761 = vpack.c.bf16 %v639, %v639
      %v762 = vpack.c.bf16 %v646, %v646
      %v763 = vpack.c.bf16 %v653, %v653
      %v764 = vpack.c.bf16 %v660, %v660
      %v765 = vpack.c.bf16 %v667, %v667
      %v766 = vpack.c.bf16 %v674, %v674
      %v767 = vpack.c.bf16 %v681, %v681
      %v768 = vpack.c.bf16 %v688, %v688
      %v769 = vpack.c.bf16 %v695, %v695
      %v770 = vpack.c.bf16 %v702, %v702
      %v771 = vpack.c.bf16 %v709, %v709
      %v772 = vpack.c.bf16 %v716, %v716
      %v773 = vpack.c.bf16 %v723, %v723
      %v774 = vpack.c.bf16 %v730, %v730
      %v775 = vpack.c.bf16 %v737, %v737
      %v776 = vpack.c.bf16 %v744, %v744
      %v777 = vld [vmem:[%s3] sm:$0x3]
      %v810 = vunpack.c.l.b16 %v745
      %v811 = vunpack.c.l.b16 %v746
      %v812 = vunpack.c.l.b16 %v747
      %v813 = vunpack.c.l.b16 %v748
      %v814 = vunpack.c.l.b16 %v749
      %v815 = vunpack.c.l.b16 %v750
      %v816 = vunpack.c.l.b16 %v751
      %v817 = vunpack.c.l.b16 %v752
      %v818 = vunpack.c.l.b16 %v753
      %v819 = vunpack.c.l.b16 %v754
      %v820 = vunpack.c.l.b16 %v755
      %v821 = vunpack.c.l.b16 %v756
      %v822 = vunpack.c.l.b16 %v757
      %v823 = vunpack.c.l.b16 %v758
      %v824 = vunpack.c.l.b16 %v759
      %v825 = vunpack.c.l.b16 %v760
      %v826 = vunpack.c.l.b16 %v761
      %v827 = vunpack.c.l.b16 %v762
      %v828 = vunpack.c.l.b16 %v763
      %v829 = vunpack.c.l.b16 %v764
      %v830 = vunpack.c.l.b16 %v765
      %v831 = vunpack.c.l.b16 %v766
      %v832 = vunpack.c.l.b16 %v767
      %v833 = vunpack.c.l.b16 %v768
      %v834 = vunpack.c.l.b16 %v769
      %v835 = vunpack.c.l.b16 %v770
      %v836 = vunpack.c.l.b16 %v771
      %v837 = vunpack.c.l.b16 %v772
      %v838 = vunpack.c.l.b16 %v773
      %v839 = vunpack.c.l.b16 %v774
      %v840 = vunpack.c.l.b16 %v775
      %v841 = vunpack.c.l.b16 %v776
      %vm842 = vcmask 1041409
      %v843 = vsel %vm842, %v811, %v810
      %vm844 = vcmask 1042434
      %v845 = vsel %vm844, %v812, %v843
      %vm846 = vcmask 1043459
      %v847 = vsel %vm846, %v813, %v845
      %vm848 = vcmask 1044484
      %v849 = vsel %vm848, %v814, %v847
      %vm850 = vcmask 1045509
      %v851 = vsel %vm850, %v815, %v849
      %vm852 = vcmask 1046534
      %v853 = vsel %vm852, %v816, %v851
      %vm854 = vcmask 1047559
      %v855 = vsel %vm854, %v817, %v853
      %v856 = vsel %vm842, %v819, %v818
      %v857 = vsel %vm844, %v820, %v856
      %v858 = vsel %vm846, %v821, %v857
      %v859 = vsel %vm848, %v822, %v858
      %v860 = vsel %vm850, %v823, %v859
      %v861 = vsel %vm852, %v824, %v860
      %v862 = vsel %vm854, %v825, %v861
      %v863 = vsel %vm842, %v827, %v826
      %v864 = vsel %vm844, %v828, %v863
      %v865 = vsel %vm846, %v829, %v864
      %v866 = vsel %vm848, %v830, %v865
      %v867 = vsel %vm850, %v831, %v866
      %v868 = vsel %vm852, %v832, %v867
      %v869 = vsel %vm854, %v833, %v868
      %v870 = vsel %vm842, %v835, %v834
      %v871 = vsel %vm844, %v836, %v870
      %v872 = vsel %vm846, %v837, %v871
      %v873 = vsel %vm848, %v838, %v872
      %v874 = vsel %vm850, %v839, %v873
      %v875 = vsel %vm852, %v840, %v874
      %v876 = vsel %vm854, %v841, %v875
      %v877 = vpack.c.b16 %v862, %v855
      %v878 = vpack.c.b16 %v876, %v869
      %v880 = vsel %vm319, %v877, 0
      %v883 = vsel %vm319, %v878, 0
      %vm885 = vcmask 1041408
      %v887 = vsel %vm885, %v777, 0
      %889 = vmatprep.subr.bf16.mxu0 0
      %890 = vmatpush1.bf16.msra.mxu0 0
      %891 = vmatprep.subr.bf16.mxu0 0
      %892 = vmatpush1.bf16.msra.mxu0 0
      %893 = vmatprep.subr.bf16.mxu0 0
      %894 = vmatpush1.bf16.msra.mxu0 0
      %895 = vmatprep.subr.bf16.mxu0 0
      %896 = vmatpush1.bf16.msra.mxu0 0
      %897 = vmatprep.subr.bf16.mxu0 0
      %898 = vmatpush1.bf16.msra.mxu0 0
      %899 = vmatprep.subr.bf16.mxu0 0
      %900 = vmatpush1.bf16.msra.mxu0 0
      %901 = vmatprep.subr.bf16.mxu0 0
      %902 = vmatpush1.bf16.msra.mxu0 0
      %903 = vmatprep.subr.bf16.mxu0 0
      %904 = vmatpush1.bf16.msra.mxu0 %v887
      %905 = vmatprep.subr.bf16.mxu0 0
      %906 = vmatpush2.bf16.msra.mxu0 0
      %907 = vmatprep.subr.bf16.mxu0 0
      %908 = vmatpush2.bf16.msra.mxu0 0
      %909 = vmatprep.subr.bf16.mxu0 0
      %910 = vmatpush2.bf16.msra.mxu0 0
      %911 = vmatprep.subr.bf16.mxu0 0
      %912 = vmatpush2.bf16.msra.mxu0 0
      %913 = vmatprep.subr.bf16.mxu0 0
      %914 = vmatpush2.bf16.msra.mxu0 0
      %915 = vmatprep.subr.bf16.mxu0 0
      %916 = vmatpush2.bf16.msra.mxu0 0
      %917 = vmatprep.subr.bf16.mxu0 0
      %918 = vmatpush2.bf16.msra.mxu0 0
      %919 = vmatprep.subr.bf16.mxu0 0
      %920 = vmatpush2.bf16.msra.mxu0 0
      %921 = vmatprep.mubr.bf16.mxu0 0
      %922 = vmatmul.mubr.bf16.gmra.mxu0 %v880
      %v923 = vpop.f32.mrf.mxu0
      %v924 = vadd.f32 0.0, %v923
      %v925 = vpop.f32.mrf.mxu0
      %v926 = vpop.f32.mrf.mxu0
      %v927 = vadd.f32 0.0, %v926
      %v928 = vpop.f32.mrf.mxu0
      %929 = vmatprep.mubr.bf16.mxu0 0
      %930 = vmatmul.mubr.bf16.gmra.mxu0 %v883
      %v931 = vpop.f32.mrf.mxu0
      %v932 = vadd.f32 0.0, %v931
      %v933 = vpop.f32.mrf.mxu0
      %v934 = vpop.f32.mrf.mxu0
      %v935 = vadd.f32 0.0, %v934
      %v936 = vpop.f32.mrf.mxu0
      %937 = vdwg.mxu0
      %vm938 = vcmask 15360
      %939 = vst.msk [vmem:[%s238] sm:$0xff] %vm938, %v924
      %940 = vst.msk [vmem:[%s238 + $0x8] sm:$0xff] %vm938, %v927
      %941 = vst.msk [vmem:[%s238 + $0x10] sm:$0xff] %vm938, %v932
      %942 = vst.msk [vmem:[%s238 + $0x18] sm:$0xff] %vm938, %v935
      %s943 = smul.u32 4, %s20
      %p944 = scmp.lt.s32.totalorder %s19, 1
      %s945 = scalar_select %p944, %s19, 1
      %p946 = scmp.lt.s32.totalorder %s943, 7
      %s947 = scalar_select %p946, %s943, 7
      %s948 = smul.addr %s945, 8
      %s949 = sadd.s32 %s947, %s948
      %s950 = smul.addr %s949, 8
      %s951 = scalar_lea.vmem %s4, %s950
      // Predicated region
      $region37: #{tpu_custom_call.1} parent=35 // pred_check
        %p952 = pneg %p138
      $region38: #{tpu_custom_call.1} parent=35 // pred_check_branch
        %954 = sbr.rel (%p952) target = $region40
      $region39: #{tpu_custom_call.1} parent=35 // pred_region
        %s955 = smul.u32 4, %s20
      $region40: #{tpu_custom_call.1} parent=35 // pred_fallthru
        _
    $region36: #{tpu_custom_call.1} parent=5 // pred_fallthru
      _
    %p956 = scmp.le.s32.totalorder 2, %s10
    // Predicated region
    $region41: #{tpu_custom_call.1} parent=5 // pred_check
      %p957 = pneg %p956
    $region42: #{tpu_custom_call.1} parent=5 // pred_check_branch
      %959 = sbr.rel (%p957) target = $region44
    $region43: #{tpu_custom_call.1} parent=5 // pred_region
      %s960 = ssub.s32 %s10, 2
      // Predicated region
      $region45: #{tpu_custom_call.1} parent=43 // pred_check
        %p961 = pneg %p144
      $region46: #{tpu_custom_call.1} parent=43 // pred_check_branch
        %963 = sbr.rel (%p961) target = $region48
      $region47: #{tpu_custom_call.1} parent=43 // pred_region
        %s964 = smul.u32 4, %s22
        %p965 = scmp.lt.s32.totalorder %s21, 1
        %s966 = scalar_select %p965, %s21, 1
        %p967 = scmp.lt.s32.totalorder %s964, 7
        %s968 = scalar_select %p967, %s964, 7
        %s969 = smul.addr %s966, 8
        %s970 = sadd.s32 %s968, %s969
        %s971 = smul.addr %s970, 8
        %s972 = scalar_lea.vmem %s4, %s971
      $region48: #{tpu_custom_call.1} parent=43 // pred_fallthru
        _
    $region44: #{tpu_custom_call.1} parent=5 // pred_fallthru
      _
  $region6: #{tpu_custom_call.1} parent=0 // loop_footer
    %s14 = sadd.s32 1, %s10
  $region7: #{tpu_custom_call.1} parent=0 // loop_footer_branch
    %9 = sbr.rel target = $region3
  $region8: #{tpu_custom_call.1} parent=0 // loop_exit
    _

</llo_original>
